<compile_context>
chip_gen: v6e
topology: v6e:2x2x1
jax: 0.10.0
libtpu: 0.0.40
codegen_flags: <defaults>
</compile_context>

<pallas_src>
import jax
import jax.numpy as jnp
from jax.experimental import pallas as pl
from jax.experimental.pallas import tpu as pltpu


def snake_kernel(x_ref, a_ref, inv_a_ref, o_ref):
    x = x_ref[...]           # (tile_m, F)
    a = a_ref[...]           # (1, F) -> broadcast over rows
    inv_a = inv_a_ref[...]   # (1, F), precomputed where(a==0, 0, 1/a)
    s = jnp.sin(a * x)
    o_ref[...] = x + (s * s) * inv_a


def _round_up(n, m):
    return ((n + m - 1) // m) * m


def _row_tile(M, F, itemsize, block_byte_budget):
    """Rows per block: byte-budgeted, multiple of 8, grid kept >= 2 when sensible."""
    budget_rows = max(8, (block_byte_budget // (itemsize * F)) // 8 * 8)
    if M <= budget_rows:
        if M >= 16:
            # Split "fits in one block" inputs into >=2 steps so both v7x TCs work.
            return min(_round_up(pl.cdiv(M, 2), 8), _round_up(M, 8))
        return M  # tiny input: block equals full row extent (allowed even if not %8)
    return budget_rows


def snake(x, a, *, block_byte_budget=4 * 1024 * 1024):
    """x: (..., F), a: (F,). Returns same shape/dtype as x (forward pass only)."""
    orig_shape = x.shape
    F = orig_shape[-1]
    assert a.shape == (F,), f"expected a of shape ({F},), got {a.shape}"

    x2 = x.reshape(-1, F)
    M = x2.shape[0]
    itemsize = jnp.dtype(x.dtype).itemsize
    tile = _row_tile(M, F, itemsize, block_byte_budget)
    grid = (pl.cdiv(M, tile),)

    a2 = a.reshape(1, F)
    inv_a2 = jnp.where(a2 == 0, jnp.zeros_like(a2), 1.0 / a2)

    out = pl.pallas_call(
        snake_kernel,
        out_shape=jax.ShapeDtypeStruct((M, F), x.dtype),
        grid_spec=pltpu.PrefetchScalarGridSpec(
            num_scalar_prefetch=0,
            grid=grid,
            in_specs=[
                pl.BlockSpec((tile, F), lambda i: (i, 0)),
                pl.BlockSpec((1, F), lambda i: (0, 0)),
                pl.BlockSpec((1, F), lambda i: (0, 0)),
            ],
            out_specs=pl.BlockSpec((tile, F), lambda i: (i, 0)),
        ),
        compiler_params=pltpu.CompilerParams(
            dimension_semantics=("parallel",),
            # ~16 MiB resident at the 4 MiB default block (double-buffered in+out);
            # explicit limit is required on v5e (16 MiB scoped default) and stays
            # under v7x's 64 MiB physical VMEM.
            vmem_limit_bytes=32 * 1024 * 1024,
        ),
    )(x2, a2, inv_a2)

    return out.reshape(orig_shape)


# TODO(synk): backward pass (grad_x, grad_a) of SnakeFunction is not implemented here;
# only the forward semantics are translated.

if __name__ == "__main__":
    key = jax.random.PRNGKey(0)

    # Small shapes consistent with the module: batch=2, seq=10 (ragged last block),
    # in_features=128 (lane-dense feature axis).
    B, T, F = 2, 10, 128
    x = jax.random.normal(key, (B, T, F), dtype=jnp.float32)

    # Deterministic parameter init (module would do torch.full((F,), a)).
    a = jnp.full((F,), 0.5, dtype=jnp.float32)
    a = a.at[0].set(0.0)  # exercise the a == 0 branch of torch.where

    y = snake(x, a)
    jax.block_until_ready(y)

    # Reference in plain JAX (same semantics as SnakeFunction.forward).
    a_b = a.reshape(1, 1, F)
    ref = jnp.where(a_b == 0, x,
                    x + jnp.sin(a_b * x) ** 2 / jnp.where(a_b == 0, 1.0, a_b))
    assert jnp.allclose(y, ref, atol=1e-6, rtol=1e-6), "mismatch vs reference"

    # Larger shape spanning multiple grid steps with a non-divisible row count
    # (exercises the cdiv/ragged-block path without any pad/slice copies).
    x_big = jax.random.normal(jax.random.PRNGKey(1), (4, 1100, F), dtype=jnp.float32)
    y_big = snake(x_big, a)
    jax.block_until_ready(y_big)
    ref_big = jnp.where(a_b == 0, x_big,
                        x_big + jnp.sin(a_b * x_big) ** 2 / jnp.where(a_b == 0, 1.0, a_b))
    assert jnp.allclose(y_big, ref_big, atol=1e-6, rtol=1e-6), "mismatch vs reference (big)"

    print("KERNEL_OK")
</pallas_src>

<mosaic_0001>
module attributes {stable_mosaic.version = 11 : i64} {
  func.func @snake_kernel(%arg0: i32, %arg1: memref<16x128xf32, #tpu.memory_space<vmem>>, %arg2: memref<1x128xf32, #tpu.memory_space<vmem>>, %arg3: memref<1x128xf32, #tpu.memory_space<vmem>>, %arg4: memref<16x128xf32, #tpu.memory_space<vmem>>) attributes {dimension_semantics = [#tpu.dimension_semantics<parallel>], iteration_bounds = array<i64: 2>, scalar_prefetch = 0 : i64, scratch_operands = 0 : i64, tpu.core_type = #tpu.core_type<tc>, window_params = [{transform_indices = @transform_0, window_bounds = array<i64: 16, 128>}, {pipeline_mode = #tpu.pipeline_mode<synchronous>, transform_indices = @transform_1, window_bounds = array<i64: 1, 128>}, {pipeline_mode = #tpu.pipeline_mode<synchronous>, transform_indices = @transform_2, window_bounds = array<i64: 1, 128>}, {transform_indices = @transform_3, window_bounds = array<i64: 16, 128>}]} {
    %c0 = arith.constant 0 : index
    %c0_0 = arith.constant 0 : index
    %0 = vector.load %arg1[%c0, %c0_0] : memref<16x128xf32, #tpu.memory_space<vmem>>, vector<16x128xf32>
    %c0_1 = arith.constant 0 : index
    %c0_2 = arith.constant 0 : index
    %1 = vector.load %arg2[%c0_1, %c0_2] : memref<1x128xf32, #tpu.memory_space<vmem>>, vector<1x128xf32>
    %c0_3 = arith.constant 0 : index
    %c0_4 = arith.constant 0 : index
    %2 = vector.load %arg3[%c0_3, %c0_4] : memref<1x128xf32, #tpu.memory_space<vmem>>, vector<1x128xf32>
    %3 = vector.broadcast %1 : vector<1x128xf32> to vector<16x128xf32>
    %4 = arith.mulf %3, %0 : vector<16x128xf32>
    %5 = math.sin %4 : vector<16x128xf32>
    %6 = arith.mulf %5, %5 : vector<16x128xf32>
    %7 = vector.broadcast %2 : vector<1x128xf32> to vector<16x128xf32>
    %8 = arith.mulf %6, %7 : vector<16x128xf32>
    %9 = arith.addf %0, %8 : vector<16x128xf32>
    %c0_5 = arith.constant 0 : index
    %c0_6 = arith.constant 0 : index
    %10 = vector.load %arg4[%c0_5, %c0_6] : memref<16x128xf32, #tpu.memory_space<vmem>>, vector<16x128xf32>
    tpu.vector_store %arg4[%c0_5, %c0_6], %9 {strides = array<i32>} : memref<16x128xf32, #tpu.memory_space<vmem>>, vector<16x128xf32>,
    return
  }
  func.func @transform_0(%arg0: i32) -> (i32, i32) {
    %c0_i32 = arith.constant 0 : i32
    %c0_i32_0 = arith.constant 0 : i32
    return %arg0, %c0_i32 : i32, i32
  }
  func.func @transform_1(%arg0: i32) -> (i32, i32) {
    %c0_i32 = arith.constant 0 : i32
    %c0_i32_0 = arith.constant 0 : i32
    %c0_i32_1 = arith.constant 0 : i32
    return %c0_i32, %c0_i32_0 : i32, i32
  }
  func.func @transform_2(%arg0: i32) -> (i32, i32) {
    %c0_i32 = arith.constant 0 : i32
    %c0_i32_0 = arith.constant 0 : i32
    %c0_i32_1 = arith.constant 0 : i32
    return %c0_i32, %c0_i32_0 : i32, i32
  }
  func.func @transform_3(%arg0: i32) -> (i32, i32) {
    %c0_i32 = arith.constant 0 : i32
    %c0_i32_0 = arith.constant 0 : i32
    return %arg0, %c0_i32 : i32, i32
  }
}

</mosaic_0001>

<llo_original>
// kernel: tpu_custom_call.1
$region0: #{tpu_custom_call.1}
  #allocation0 [shape = 'u32[]', space=smem, size = 0x4, offset = 0x4, fixed_abs, tag = 'smem constant byte address 0x4 - core index']
  #allocation1 [shape = 'u32[144,128]{1,0:T(1,128)}', space=vmem, size = 0x12000, scoped, tag = 'internal scratch']
  %s0 = inlined_call_operand.hbm [shape: f32[20,128], index: 0, kind: input, shape index: {}]
  %s1 = inlined_call_operand.vmem [shape: f32[1,128], index: 1, kind: input, shape index: {}]
  %s2 = inlined_call_operand.vmem [shape: f32[1,128], index: 2, kind: input, shape index: {}]
  %s3 = inlined_call_operand.hbm [shape: f32[20,128], index: 3, kind: output, shape index: {}]
  %s4 = sld [smem:[#allocation0]]
  $region49: #{tpu_custom_call.1} parent=0
    _
  %s6 = ssub.s32 1, %s4
  %s7 = scalar_select 0, %s6, %s4
  $region1: #{tpu_custom_call.1} parent=0
    #allocation2 [shape = 'u8[16384]{0}', space=vmem, size = 0x4000, scoped, tag = 'input window, operand 0']
    #allocation3 [shape = 's32[2]{0}', space=sflag, size = 0x8, scoped, tag = 'scoped memory for tpu_custom_call.1']
    #allocation4 [shape = 's32[2]{0}', space=sflag, size = 0x8, scoped, tag = 'scoped memory for tpu_custom_call.1']
    #allocation5 [shape = 'u8[16384]{0}', space=vmem, size = 0x4000, scoped, tag = 'output window, operand 0']
    %8 = vsyncpa [#allocation3], 0
    %s9 = scalar_lea.sflag [#allocation3], 1
    %10 = vsyncpa %s9, 0
    %11 = vsyncpa [#allocation4], 0
    %s12 = scalar_lea.sflag [#allocation4], 1
    %13 = vsyncpa %s12, 0
    loop: start=0, step=1, limit=4
    $region2: #{tpu_custom_call.1} parent=1 // loop_pre_header
      _
    $region3: #{tpu_custom_call.1} parent=1 // loop_header
      %s15 = sphi 0, %s19
      %p16 = scmp.ge.s32.totalorder %s15, 4
      %s25 = sphi 0, %s27
      %s28 = sphi 0, %s25
      %s29 = sphi 0, %s28
      %s45 = sphi 0, %s29
      %s49 = sphi 0, %s49
      %s51 = sphi 0, %s49
      %s52 = sphi 0, %s51
      %s66 = sphi 0, %s52
      %s70 = sphi 0, %s70
      %s72 = sphi 0, %s70
      %s73 = sphi 0, %s72
      %s87 = sphi 0, %s73
      %s93 = sphi 0, %s95
      %s96 = sphi 0, %s93
      %s97 = sphi 0, %s96
      %s113 = sphi 0, %s97
    $region4: #{tpu_custom_call.1} parent=1 // loop_header_branch
      %18 = sbr.rel (%p16) target = $region8
    $region5: #{tpu_custom_call.1} parent=1 // loop_body
      %s20 = ssub.s32 %s15, 1
      %s21 = ssub.s32 %s15, 2
      %s22 = sadd.s32 %s15, 1
      %s23 = ssub.s32 %s15, %s22
      %p24 = scmp.eq.s32.totalorder %s23, 0
      %s26 = sadd.s32 %s25, 1
      %s27 = scalar_select %p24, %s25, %s26
      %p30 = pneg %p24
      %p31 = scmp.eq.s32.totalorder %s15, 1
      %p32 = por %p30, %p31
      %p33 = scmp.ne.s32.totalorder %s25, %s28
      %p34 = scmp.eq.s32.totalorder %s15, 0
      %p35 = por %p33, %p34
      %p36 = scmp.ne.s32.totalorder %s25, %s28
      %p37 = scmp.eq.s32.totalorder %s20, 1
      %p38 = por %p36, %p37
      %p39 = scmp.ne.s32.totalorder %s28, %s29
      %p40 = scmp.eq.s32.totalorder %s20, 0
      %p41 = por %p39, %p40
      %p42 = scmp.ne.s32.totalorder %s28, %s29
      %p43 = scmp.eq.s32.totalorder %s21, 1
      %p44 = por %p42, %p43
      %p46 = scmp.ne.s32.totalorder %s29, %s45
      %p47 = scmp.eq.s32.totalorder %s21, 0
      %p48 = por %p46, %p47
      %s50 = sadd.s32 %s49, 1
      %p53 = scmp.eq.s32.totalorder %s15, 1
      %p54 = scmp.ne.s32.totalorder %s49, %s51
      %p55 = scmp.eq.s32.totalorder %s15, 0
      %p56 = por %p54, %p55
      %p57 = scmp.ne.s32.totalorder %s49, %s51
      %p58 = scmp.eq.s32.totalorder %s20, 1
      %p59 = por %p57, %p58
      %p60 = scmp.ne.s32.totalorder %s51, %s52
      %p61 = scmp.eq.s32.totalorder %s20, 0
      %p62 = por %p60, %p61
      %p63 = scmp.ne.s32.totalorder %s51, %s52
      %p64 = scmp.eq.s32.totalorder %s21, 1
      %p65 = por %p63, %p64
      %p67 = scmp.ne.s32.totalorder %s52, %s66
      %p68 = scmp.eq.s32.totalorder %s21, 0
      %p69 = por %p67, %p68
      %s71 = sadd.s32 %s70, 1
      %p74 = scmp.eq.s32.totalorder %s15, 1
      %p75 = scmp.ne.s32.totalorder %s70, %s72
      %p76 = scmp.eq.s32.totalorder %s15, 0
      %p77 = por %p75, %p76
      %p78 = scmp.ne.s32.totalorder %s70, %s72
      %p79 = scmp.eq.s32.totalorder %s20, 1
      %p80 = por %p78, %p79
      %p81 = scmp.ne.s32.totalorder %s72, %s73
      %p82 = scmp.eq.s32.totalorder %s20, 0
      %p83 = por %p81, %p82
      %p84 = scmp.ne.s32.totalorder %s72, %s73
      %p85 = scmp.eq.s32.totalorder %s21, 1
      %p86 = por %p84, %p85
      %p88 = scmp.ne.s32.totalorder %s73, %s87
      %p89 = scmp.eq.s32.totalorder %s21, 0
      %p90 = por %p88, %p89
      %s91 = ssub.s32 %s15, %s22
      %p92 = scmp.eq.s32.totalorder %s91, 0
      %s94 = sadd.s32 %s93, 1
      %s95 = scalar_select %p92, %s93, %s94
      %p98 = pneg %p92
      %p99 = scmp.eq.s32.totalorder %s15, 1
      %p100 = por %p98, %p99
      %p101 = scmp.ne.s32.totalorder %s93, %s96
      %p102 = scmp.eq.s32.totalorder %s15, 0
      %p103 = por %p101, %p102
      %p104 = scmp.ne.s32.totalorder %s93, %s96
      %p105 = scmp.eq.s32.totalorder %s20, 1
      %p106 = por %p104, %p105
      %p107 = scmp.ne.s32.totalorder %s96, %s97
      %p108 = scmp.eq.s32.totalorder %s20, 0
      %p109 = por %p107, %p108
      %p110 = scmp.ne.s32.totalorder %s96, %s97
      %p111 = scmp.eq.s32.totalorder %s21, 1
      %p112 = por %p110, %p111
      %p114 = scmp.ne.s32.totalorder %s97, %s113
      %p115 = scmp.eq.s32.totalorder %s21, 0
      %p116 = por %p114, %p115
      %p117 = scmp.le.s32.totalorder 1, %s15
      %p118 = scmp.lt.s32.totalorder %s15, 3
      %p119 = pnand %p117, %p118
      %p120 = pneg %p119
      // Predicated region
      $region9: #{tpu_custom_call.1} parent=5 // pred_check
        _
      $region10: #{tpu_custom_call.1} parent=5 // pred_check_branch
        %122 = sbr.rel (%p119) target = $region12
      $region11: #{tpu_custom_call.1} parent=5 // pred_region
        %s123 = ssub.s32 %s15, 1
        // Predicated region
        $region13: #{tpu_custom_call.1} parent=11 // pred_check
          %p124 = pneg %p62
        $region14: #{tpu_custom_call.1} parent=11 // pred_check_branch
          %126 = sbr.rel (%p124) target = $region16
        $region15: #{tpu_custom_call.1} parent=11 // pred_region
          _
        $region16: #{tpu_custom_call.1} parent=11 // pred_fallthru
          _
        // Predicated region
        $region17: #{tpu_custom_call.1} parent=11 // pred_check
          %p127 = pneg %p83
        $region18: #{tpu_custom_call.1} parent=11 // pred_check_branch
          %129 = sbr.rel (%p127) target = $region20
        $region19: #{tpu_custom_call.1} parent=11 // pred_region
          _
        $region20: #{tpu_custom_call.1} parent=11 // pred_fallthru
          _
      $region12: #{tpu_custom_call.1} parent=5 // pred_fallthru
        _
      %p130 = scmp.lt.s32.totalorder %s15, 2
      // Predicated region
      $region21: #{tpu_custom_call.1} parent=5 // pred_check
        %p131 = pneg %p130
      $region22: #{tpu_custom_call.1} parent=5 // pred_check_branch
        %133 = sbr.rel (%p131) target = $region24
      $region23: #{tpu_custom_call.1} parent=5 // pred_region
        // Predicated region
        $region25: #{tpu_custom_call.1} parent=23 // pred_check
          %p134 = pneg %p35
        $region26: #{tpu_custom_call.1} parent=23 // pred_check_branch
          %136 = sbr.rel (%p134) target = $region28
        $region27: #{tpu_custom_call.1} parent=23 // pred_region
          %s137 = sand.u32 %s25, 1
          %s138 = scalar_lea.sflag [#allocation3], %s137
          %s139 = sand.u32 %s25, 1
          %s140 = smul.addr %s139, 16
          %s141 = scalar_lea.vmem [#allocation2], %s140
          %s142 = smul.u32 2, %s15
          %s143 = ssub.s32 3, %s142
          %p144 = scmp.lt.s32.totalorder %s143, 2
          %s145 = scalar_select %p144, %s143, 2
          %s146 = smul.u32 128, %s145
          %s148 = ssub.s32 256, %s146
          %149 = vsyncadd %s138, %s148
          %p150 = scmp.ne.s32.totalorder 0, %s146
          %s151 = smul.addr %s142, 128
          %s152 = scalar_lea.hbm %s0, %s151
          %s153 = smul.u32 8, %s145
          %s154 = sshll.u32 %s141, 4
          %s155 = int_to_ptr.vmem [resolvable:$true] %s154
          %s156 = sshll.u32 %s153, 4
          %160 = dma.hbm_to_vmem [thread:$0]  (%p150), %s152, %s156, %s155, %s138, 128, 128, 8
        $region28: #{tpu_custom_call.1} parent=23 // pred_fallthru
          _
      $region24: #{tpu_custom_call.1} parent=5 // pred_fallthru
        _
      %p161 = scmp.le.s32.totalorder 1, %s15
      %p162 = scmp.lt.s32.totalorder %s15, 3
      %p163 = pnand %p161, %p162
      %p164 = pneg %p163
      // Predicated region
      $region29: #{tpu_custom_call.1} parent=5 // pred_check
        _
      $region30: #{tpu_custom_call.1} parent=5 // pred_check_branch
        %166 = sbr.rel (%p163) target = $region32
      $region31: #{tpu_custom_call.1} parent=5 // pred_region
        %s167 = ssub.s32 %s15, 1
        %s168 = sand.u32 %s28, 1
        %s169 = scalar_lea.sflag [#allocation3], %s168
        %s170 = sand.u32 %s28, 1
        %s171 = smul.addr %s170, 16
        %s172 = scalar_lea.vmem [#allocation2], %s171
        // Predicated region
        $region33: #{tpu_custom_call.1} parent=31 // pred_check
          %p173 = pneg %p41
        $region34: #{tpu_custom_call.1} parent=31 // pred_check_branch
          %175 = sbr.rel (%p173) target = $region36
        $region35: #{tpu_custom_call.1} parent=31 // pred_region
          %176 = dma.done %s169, 256
        $region36: #{tpu_custom_call.1} parent=31 // pred_fallthru
          _
        %s177 = sand.u32 %s28, 1
        %s178 = scalar_lea.sflag [#allocation3], %s177
        %s179 = sand.u32 %s28, 1
        %s180 = smul.addr %s179, 16
        %s181 = scalar_lea.vmem [#allocation2], %s180
        %p182 = pneg %p41
        %p183 = pneg %p38
        %p184 = pneg %p62
        %p185 = pneg %p59
        %p186 = pneg %p83
        %p187 = pneg %p80
        %p188 = pneg %p109
        %p189 = pneg %p106
        %s190 = sand.u32 %s96, 1
        %s191 = scalar_lea.sflag [#allocation4], %s190
        %s192 = sand.u32 %s96, 1
        %s193 = smul.addr %s192, 16
        %s194 = scalar_lea.vmem [#allocation5], %s193
        %s195 = smul.u32 2, %s20
        %s196 = ssub.s32 3, %s195
        %p197 = scmp.lt.s32.totalorder %s196, 2
        %s198 = scalar_select %p197, %s196, 2
        %s199 = smul.u32 128, %s198
        %s200 = smul.u32 2, %s20
        %s201 = ssub.s32 3, %s200
        %p202 = scmp.lt.s32.totalorder %s201, 2
        %s203 = scalar_select %p202, %s201, 2
        %s204 = smul.u32 128, %s203
        %v205 = vld [vmem:[%s172] sm:$0xff]
        %v206 = vld [vmem:[%s172 + $0x8] sm:$0xff]
        %v207 = vld [vmem:[%s1] sm:$0x1]
        %v208 = vld [vmem:[%s2] sm:$0x1]
        %v210 = vlaneseq
        %v211 = vshrl.u32 %v210, 7
        %v212 = vsub.s32 0, %v211
        %v213 = vrot.slane %v207, %v212
        %v215 = vmul.f32 %v213, %v205
        %v216 = vmul.f32 %v213, %v206
        %v217 = vand.u32 2147483647, %v215
        %vm218 = vcmp.le.f32.partialorder %v217, 0.7853982
        %vm219 = vcmp.lt.s32.totalorder %v215, 0
        %v220 = vand.u32 %v215, 2139095040
        %v221 = vshrl.u32 %v220, 23
        %v222 = vsub.s32 %v221, 127
        %v223 = vand.u32 2147483647, %v215
        %v224 = vand.u32 %v223, 8388607
        %v225 = vor.u32 %v224, 8388608
        %v226 = vsub.s32 0, %v225
        %v227 = vadd.s32 %v222, 1
        %vm228 = vcmp.gt.s32.totalorder %v227, 0
        %v229 = vsel %vm228, %v227, 0
        %v230 = vshrl.u32 %v229, 5
        %v231 = vand.u32 %v229, 31
        %v232 = vsub.s32 32, %v231
        %v233 = vshrl.u32 683565275, %v232
        %v234 = vshll.u32 683565275, %v231
        %v235 = vshrl.u32 2475754826, %v232
        %v236 = vor.u32 %v234, %v235
        %v237 = vshll.u32 2475754826, %v231
        %v238 = vshrl.u32 2131351028, %v232
        %v239 = vor.u32 %v237, %v238
        %v240 = vshll.u32 2131351028, %v231
        %v241 = vshrl.u32 2102212464, %v232
        %v242 = vor.u32 %v240, %v241
        %v243 = vshll.u32 2102212464, %v231
        %v244 = vshrl.u32 920167782, %v232
        %v245 = vor.u32 %v243, %v244
        %v246 = vshll.u32 920167782, %v231
        %v247 = vshrl.u32 1326507024, %v232
        %v248 = vor.u32 %v246, %v247
        %vm249 = vcmp.lt.s32.totalorder %v230, 1
        %vm250 = vcmp.lt.s32.totalorder %v230, 2
        %vm251 = vcmp.lt.s32.totalorder %v230, 3
        %vm252 = vcmp.lt.s32.totalorder %v230, 4
        %v253 = vsel %vm249, %v233, %v236
        %v254 = vsel %vm252, %v242, 2102212464
        %v255 = vsel %vm251, %v239, %v254
        %v256 = vsel %vm250, %v253, %v255
        %v257 = vsel %vm249, %v236, %v239
        %v258 = vsel %vm252, %v245, 920167782
        %v259 = vsel %vm251, %v242, %v258
        %v260 = vsel %vm250, %v257, %v259
        %v261 = vsel %vm249, %v239, %v242
        %v262 = vsel %vm252, %v248, 1326507024
        %v263 = vsel %vm251, %v245, %v262
        %v264 = vsel %vm250, %v261, %v263
        %v265 = vshll.u32 %v225, 8
        %v266 = vmul.u32.u64.compose %v265, %v264
        %v267 = vextract.low.u32 %v266
        %v268 = vextract.high.u32 %v266
        %v269 = vmul.u32.u64.compose %v265, %v260
        %v270 = vextract.low.u32 %v269
        %v271 = vextract.high.u32 %v269
        %v272 = vmul.u32 %v265, %v256
        %v273 = vadd.s32 %v268, %v270
        %vm274 = vc.u32 %v268, %v270
        %v275 = vadd.s32 %v271, 1
        %v276 = vsel %vm274, %v275, %v271
        %v277 = vadd.s32 %v272, %v276
        %v278 = vadd.s32 %v277, 536870912
        %v279 = vshrl.u32 %v278, 30
        %v280 = vshll.u32 %v279, 30
        %v281 = vsub.s32 %v277, %v280
        %vm282 = vcmp.lt.s32.totalorder %v281, 0
        %v283 = vsub.s32 0, %v281
        %v284 = vsel %vm282, %v283, %v281
        %v285 = vclz %v284
        %v286 = vsub.s32 %v285, 2
        %vm287 = vcmp.gt.s32.totalorder 0, %v286
        %v288 = vsel %vm287, 0, %v286
        %v289 = vsub.s32 32, %v288
        %v290 = vshll.u32 %v281, %v288
        %v291 = vshrl.u32 %v273, %v289
        %v292 = vor.u32 %v290, %v291
        %v293 = vsub.s32 4294967266, %v288
        %v294 = vadd.s32 %v293, 127
        %v295 = vshll.u32 %v294, 23
        %v296 = vor.u32 4788187, %v295
        %v297 = vand.u32 2147483647, %v296
        %v299 = vcvt.s32.f32 %v292
        %v300 = vmul.f32 %v299, %v297
        %v301 = vxor.u32 %v300, 2147483648
        %v302 = vsel %vm219, %v301, %v300
        %v303 = vsub.s32 4, %v279
        %v304 = vsel %vm219, %v303, %v279
        %v305 = vsel %vm218, %v215, %v302
        %v306 = vsel %vm218, 0, %v304
        %v307 = vcosq.f32.pop %v305
        %v308 = vsinq.f32.pop %v305
        %vm309 = vweird.f32 %v215
        %v310 = vadd.s32 %v306, 3
        %v311 = vand.u32 %v310, 3
        %vm312 = vcmp.lt.s32.totalorder %v311, 2
        %vm313 = vcmp.eq.s32.totalorder %v311, 0
        %v314 = vxor.u32 %v308, 2147483648
        %v315 = vsel %vm313, %v307, %v314
        %vm316 = vcmp.eq.s32.totalorder %v311, 2
        %v317 = vxor.u32 %v307, 2147483648
        %v318 = vsel %vm316, %v317, %v308
        %v319 = vsel %vm312, %v315, %v318
        %v320 = vsel %vm309, nan, %v319
        %v321 = vand.u32 2147483647, %v216
        %vm322 = vcmp.le.f32.partialorder %v321, 0.7853982
        %vm323 = vcmp.lt.s32.totalorder %v216, 0
        %v324 = vand.u32 %v216, 2139095040
        %v325 = vshrl.u32 %v324, 23
        %v326 = vsub.s32 %v325, 127
        %v327 = vand.u32 2147483647, %v216
        %v328 = vand.u32 %v327, 8388607
        %v329 = vor.u32 %v328, 8388608
        %v330 = vsub.s32 0, %v329
        %v331 = vadd.s32 %v326, 1
        %vm332 = vcmp.gt.s32.totalorder %v331, 0
        %v333 = vsel %vm332, %v331, 0
        %v334 = vshrl.u32 %v333, 5
        %v335 = vand.u32 %v333, 31
        %v336 = vsub.s32 32, %v335
        %v337 = vshrl.u32 683565275, %v336
        %v338 = vshll.u32 683565275, %v335
        %v339 = vshrl.u32 2475754826, %v336
        %v340 = vor.u32 %v338, %v339
        %v341 = vshll.u32 2475754826, %v335
        %v342 = vshrl.u32 2131351028, %v336
        %v343 = vor.u32 %v341, %v342
        %v344 = vshll.u32 2131351028, %v335
        %v345 = vshrl.u32 2102212464, %v336
        %v346 = vor.u32 %v344, %v345
        %v347 = vshll.u32 2102212464, %v335
        %v348 = vshrl.u32 920167782, %v336
        %v349 = vor.u32 %v347, %v348
        %v350 = vshll.u32 920167782, %v335
        %v351 = vshrl.u32 1326507024, %v336
        %v352 = vor.u32 %v350, %v351
        %vm353 = vcmp.lt.s32.totalorder %v334, 1
        %vm354 = vcmp.lt.s32.totalorder %v334, 2
        %vm355 = vcmp.lt.s32.totalorder %v334, 3
        %vm356 = vcmp.lt.s32.totalorder %v334, 4
        %v357 = vsel %vm353, %v337, %v340
        %v358 = vsel %vm356, %v346, 2102212464
        %v359 = vsel %vm355, %v343, %v358
        %v360 = vsel %vm354, %v357, %v359
        %v361 = vsel %vm353, %v340, %v343
        %v362 = vsel %vm356, %v349, 920167782
        %v363 = vsel %vm355, %v346, %v362
        %v364 = vsel %vm354, %v361, %v363
        %v365 = vsel %vm353, %v343, %v346
        %v366 = vsel %vm356, %v352, 1326507024
        %v367 = vsel %vm355, %v349, %v366
        %v368 = vsel %vm354, %v365, %v367
        %v369 = vshll.u32 %v329, 8
        %v370 = vmul.u32.u64.compose %v369, %v368
        %v371 = vextract.low.u32 %v370
        %v372 = vextract.high.u32 %v370
        %v373 = vmul.u32.u64.compose %v369, %v364
        %v374 = vextract.low.u32 %v373
        %v375 = vextract.high.u32 %v373
        %v376 = vmul.u32 %v369, %v360
        %v377 = vadd.s32 %v372, %v374
        %vm378 = vc.u32 %v372, %v374
        %v379 = vadd.s32 %v375, 1
        %v380 = vsel %vm378, %v379, %v375
        %v381 = vadd.s32 %v376, %v380
        %v382 = vadd.s32 %v381, 536870912
        %v383 = vshrl.u32 %v382, 30
        %v384 = vshll.u32 %v383, 30
        %v385 = vsub.s32 %v381, %v384
        %vm386 = vcmp.lt.s32.totalorder %v385, 0
        %v387 = vsub.s32 0, %v385
        %v388 = vsel %vm386, %v387, %v385
        %v389 = vclz %v388
        %v390 = vsub.s32 %v389, 2
        %vm391 = vcmp.gt.s32.totalorder 0, %v390
        %v392 = vsel %vm391, 0, %v390
        %v393 = vsub.s32 32, %v392
        %v394 = vshll.u32 %v385, %v392
        %v395 = vshrl.u32 %v377, %v393
        %v396 = vor.u32 %v394, %v395
        %v397 = vsub.s32 4294967266, %v392
        %v398 = vadd.s32 %v397, 127
        %v399 = vshll.u32 %v398, 23
        %v400 = vor.u32 4788187, %v399
        %v401 = vand.u32 2147483647, %v400
        %v403 = vcvt.s32.f32 %v396
        %v404 = vmul.f32 %v403, %v401
        %v405 = vxor.u32 %v404, 2147483648
        %v406 = vsel %vm323, %v405, %v404
        %v407 = vsub.s32 4, %v383
        %v408 = vsel %vm323, %v407, %v383
        %v409 = vsel %vm322, %v216, %v406
        %v410 = vsel %vm322, 0, %v408
        %v411 = vcosq.f32.pop %v409
        %v412 = vsinq.f32.pop %v409
        %vm413 = vweird.f32 %v216
        %v414 = vadd.s32 %v410, 3
        %v415 = vand.u32 %v414, 3
        %vm416 = vcmp.lt.s32.totalorder %v415, 2
        %vm417 = vcmp.eq.s32.totalorder %v415, 0
        %v418 = vxor.u32 %v412, 2147483648
        %v419 = vsel %vm417, %v411, %v418
        %vm420 = vcmp.eq.s32.totalorder %v415, 2
        %v421 = vxor.u32 %v411, 2147483648
        %v422 = vsel %vm420, %v421, %v412
        %v423 = vsel %vm416, %v419, %v422
        %v424 = vsel %vm413, nan, %v423
        %v425 = vmul.f32 %v320, %v320
        %v426 = vmul.f32 %v424, %v424
        %v428 = vlaneseq
        %v429 = vshrl.u32 %v428, 7
        %v430 = vsub.s32 0, %v429
        %v431 = vrot.slane %v208, %v430
        %v433 = vmul.f32 %v425, %v431
        %v434 = vmul.f32 %v426, %v431
        %v435 = vadd.f32 %v205, %v433
        %v436 = vadd.f32 %v206, %v434
        %437 = vst [vmem:[%s194] sm:$0xff] %v435
        %438 = vst [vmem:[%s194 + $0x8] sm:$0xff] %v436
        %s439 = sand.u32 %s96, 1
        %s440 = scalar_lea.sflag [#allocation4], %s439
        %s441 = sand.u32 %s96, 1
        %s442 = smul.addr %s441, 16
        %s443 = scalar_lea.vmem [#allocation5], %s442
        // Predicated region
        $region37: #{tpu_custom_call.1} parent=31 // pred_check
          %p444 = pneg %p106
        $region38: #{tpu_custom_call.1} parent=31 // pred_check_branch
          %446 = sbr.rel (%p444) target = $region40
        $region39: #{tpu_custom_call.1} parent=31 // pred_region
          %s447 = smul.u32 2, %s20
          %s448 = ssub.s32 3, %s447
          %p449 = scmp.lt.s32.totalorder %s448, 2
          %s450 = scalar_select %p449, %s448, 2
          %s451 = smul.u32 128, %s450
          %s453 = ssub.s32 256, %s451
          %454 = vsyncadd %s440, %s453
          %p455 = scmp.ne.s32.totalorder 0, %s451
          %s456 = smul.addr %s447, 128
          %s457 = scalar_lea.hbm %s3, %s456
          %s458 = smul.u32 8, %s450
          %s459 = sshll.u32 %s443, 4
          %s460 = int_to_ptr.vmem [resolvable:$true] %s459
          %s461 = sshll.u32 %s458, 4
          %465 = dma.vmem_to_hbm [thread:$0]  (%p455), %s460, %s461, %s457, %s440, 128, 128, 8
        $region40: #{tpu_custom_call.1} parent=31 // pred_fallthru
          _
      $region32: #{tpu_custom_call.1} parent=5 // pred_fallthru
        _
      %p466 = scmp.le.s32.totalorder 2, %s15
      // Predicated region
      $region41: #{tpu_custom_call.1} parent=5 // pred_check
        %p467 = pneg %p466
      $region42: #{tpu_custom_call.1} parent=5 // pred_check_branch
        %469 = sbr.rel (%p467) target = $region44
      $region43: #{tpu_custom_call.1} parent=5 // pred_region
        %s470 = ssub.s32 %s15, 2
        // Predicated region
        $region45: #{tpu_custom_call.1} parent=43 // pred_check
          %p471 = pneg %p112
        $region46: #{tpu_custom_call.1} parent=43 // pred_check_branch
          %473 = sbr.rel (%p471) target = $region48
        $region47: #{tpu_custom_call.1} parent=43 // pred_region
          %s474 = sand.u32 %s97, 1
          %s475 = scalar_lea.sflag [#allocation4], %s474
          %s476 = sand.u32 %s97, 1
          %s477 = smul.addr %s476, 16
          %s478 = scalar_lea.vmem [#allocation5], %s477
          %479 = dma.done %s475, 256
        $region48: #{tpu_custom_call.1} parent=43 // pred_fallthru
          _
      $region44: #{tpu_custom_call.1} parent=5 // pred_fallthru
        _
    $region6: #{tpu_custom_call.1} parent=1 // loop_footer
      %s19 = sadd.s32 1, %s15
    $region7: #{tpu_custom_call.1} parent=1 // loop_footer_branch
      %14 = sbr.rel target = $region3
    $region8: #{tpu_custom_call.1} parent=1 // loop_exit
      _
    %480 = vsyncpa [#allocation3], 1
    %s481 = scalar_lea.sflag [#allocation3], 1
    %482 = vsyncpa %s481, 1
    %483 = vsyncpa [#allocation4], 1
    %s484 = scalar_lea.sflag [#allocation4], 1
    %485 = vsyncpa %s484, 1

</llo_original>
